<compile_context>
chip_gen: v6e
topology: v6e:2x2x1
jax: 0.10.0
libtpu: 0.0.40
codegen_flags: <defaults>
</compile_context>

<pallas_src>
import functools

import jax
import jax.numpy as jnp
from jax import lax
from jax.experimental import pallas as pl
from jax.experimental.pallas import tpu as pltpu

LANE = 128


def _round_up(x, m):
    return (x + m - 1) // m * m


def _pad_feature_dim(f):
    # +1 leaves room for the implicit "ones" (degree) column inside padding.
    return _round_up(f + 1, LANE)


def _vmem_capacity_bytes():
    try:
        cap = getattr(pltpu.get_tpu_info(), "vmem_capacity_bytes", 0)
        if cap:
            return int(cap)
    except Exception:
        pass
    return 64 * 1024 * 1024          # conservative fallback (v7x per-TC)


def _choose_tiling(n, f_in_pad, f_out_pad, num_rels, out_itemsize,
                   force_tk=None):
    """Pick (n_pad, tm, tk, vmem_limit_bytes), generation-aware.

    tm: destination-row tile (the "parallel" grid axis).
    tk: source-node tile.  tk == n_pad means a single K tile (X effectively
        VMEM-resident, fetched once); otherwise X is K-tiled so VMEM is
        bounded independently of N (large graphs / v7x's 64 MiB VMEM).
    """
    cap = _vmem_capacity_bytes()
    # ~96 MiB on the 128 MiB parts (v5e/v6e), ~48 MiB on v7x (64 MiB / TC).
    vmem_limit = int(min(cap * 3 // 4, 96 * 1024 * 1024))
    budget = int(vmem_limit * 0.85)          # headroom for Mosaic internals

    n128 = _round_up(n, 128)
    # Full 128/256 MXU rows when possible, but always >= 2 row tiles so the
    # "parallel" axis can shard across both v7x TensorCores.
    if n128 <= 128:
        tm = 64
    elif n128 <= 256:
        tm = 128
    else:
        tm = 256

    f_max = max(f_in_pad, f_out_pad)
    fixed = (2 * num_rels * f_in_pad * f_out_pad * 2   # W stack (2 buffers)
             + 2 * f_out_pad * 4                       # bias
             + 2 * tm * f_out_pad * out_itemsize       # output double buffer
             + tm * f_in_pad * 4 + tm * f_out_pad * 4  # f32 scratch accumulators
             + 6 * tm * f_max * 4                      # Mosaic f32 temporaries
             + (2 << 20))                              # safety margin

    def a_bytes(tk):     # int8 A double buffer + in-kernel bf16 cast temporary
        return 2 * tm * tk + 2 * tm * tk

    # Option 1: single K tile -> X resident (budget 2 copies in case Mosaic
    # double-buffers the constant-index block).
    n_pad = _round_up(n128, tm)
    if (force_tk is None
            and fixed + a_bytes(n_pad) + 2 * n_pad * f_in_pad * 2 <= budget):
        return n_pad, tm, n_pad, vmem_limit

    # Option 2: K-tile X (double-buffered) along the source-node axis.
    step = max(tm, 128)                       # keeps n_pad % tm == 0 below
    if force_tk is not None:
        tk = _round_up(force_tk, step)
    else:
        per_tk = 4 * tm + 4 * f_in_pad        # A bytes + bf16 X double buffer
        tk = max(step, (budget - fixed) // per_tk // step * step)
    tk = min(tk, _round_up(n128, step))
    nk = -(-n128 // tk)                       # even split, then re-round
    tk = _round_up(-(-n128 // nk), step)
    n_pad = nk * tk
    return n_pad, tm, tk, vmem_limit


# ----------------------------- Pallas kernel ------------------------------ #
def _rgcn_layer_kernel(*refs, use_weight, apply_relu, ones_col, f_out):
    """One grid step = one (row-tile, relation, k-tile) triple."""
    if use_weight:
        a_ref, x_ref, w_ref, b_ref, o_ref, m_acc, acc_ref = refs
    else:
        a_ref, x_ref, b_ref, o_ref, m_acc, acc_ref = refs

    r = pl.program_id(1)
    k = pl.program_id(2)
    num_r = pl.num_programs(1)
    num_k = pl.num_programs(2)

    # int8 (0/1) adjacency tile -> bf16 (exact) right before the MXU matmul;
    # the cast hides under the A DMA, which is the bottleneck stream.
    a = a_ref[...].astype(jnp.bfloat16)
    prod = jnp.dot(a, x_ref[...], preferred_element_type=jnp.float32)

    @pl.when(k == 0)
    def _():
        m_acc[...] = prod                      # first K tile: assign (no zero-fill)

    @pl.when(k > 0)
    def _():
        m_acc[...] += prod

    @pl.when(k == num_k - 1)
    def _():
        m = m_acc[...]
        # Column `ones_col` of X is 1.0, so that column of m is the per-row
        # in-degree -- no XLU row reduce needed.  Zero-degree rows -> msg 0.
        deg = jnp.maximum(m[:, ones_col:ones_col + 1], 1.0)       # (TM, 1)
        msg = m * pl.reciprocal(deg, approx=True)                 # EUP recip
        if use_weight:
            # Weight stack is fully VMEM-resident; pick relation r's slice.
            contrib = jnp.dot(msg.astype(jnp.bfloat16), w_ref[r],
                              preferred_element_type=jnp.float32)
        else:
            contrib = msg

        @pl.when(r == 0)
        def _():
            acc_ref[...] = contrib             # first relation: assign

        @pl.when(r > 0)
        def _():
            acc_ref[...] += contrib            # sum over relations

        @pl.when(r == num_r - 1)
        def _():
            h = acc_ref[...] + b_ref[...]      # bias broadcast
            if apply_relu:
                h = jnp.maximum(h, 0.0)
            # Re-establish the padding convention for the next layer's input:
            # column f_out is the implicit "ones" column, columns > f_out are 0.
            col = lax.broadcasted_iota(jnp.int32, h.shape, 1)
            h = jnp.where(col == f_out, 1.0, jnp.where(col > f_out, 0.0, h))
            o_ref[...] = h.astype(o_ref.dtype)


def rgcn_layer(a, x, w, b, *, use_weight, apply_relu, f_in, f_out,
               out_dtype, tm, tk, vmem_limit):
    """One RelGraphConvLayer.

    a: (R, N_pad, N_pad) int8 0/1 adjacency (rows = dst, cols = src)
    x: (N_pad, F_in_pad) bf16 features; x[:, f_in] == 1.0 (degree column)
    w: (R, F_in_pad, F_out_pad) bf16, or None when use_weight=False
    b: (1, F_out_pad) f32 bias (zero in padding columns)
    """
    R, n_pad, n_src = a.shape
    f_in_pad = x.shape[1]
    f_out_pad = b.shape[1]
    assert n_src == x.shape[0] == n_pad
    assert n_pad % tm == 0 and n_pad % tk == 0
    if not use_weight:
        assert f_in_pad == f_out_pad

    grid = (n_pad // tm, R, n_pad // tk)       # reduction axes (R, K) last

    in_specs = [
        pl.BlockSpec((None, tm, tk), lambda i, r, k: (r, i, k)),   # A_r tile (int8)
        pl.BlockSpec((tk, f_in_pad), lambda i, r, k: (k, 0)),      # X tile (bf16)
    ]
    args = [a, x]
    if use_weight:
        in_specs.append(                                           # W (resident)
            pl.BlockSpec((R, f_in_pad, f_out_pad), lambda i, r, k: (0, 0, 0)))
        args.append(w)
    in_specs.append(pl.BlockSpec((1, f_out_pad), lambda i, r, k: (0, 0)))  # bias
    args.append(b)

    kernel = functools.partial(_rgcn_layer_kernel, use_weight=use_weight,
                               apply_relu=apply_relu, ones_col=f_in,
                               f_out=f_out)
    return pl.pallas_call(
        kernel,
        out_shape=jax.ShapeDtypeStruct((n_pad, f_out_pad), out_dtype),
        grid_spec=pltpu.PrefetchScalarGridSpec(
            num_scalar_prefetch=0,
            grid=grid,
            in_specs=in_specs,
            out_specs=pl.BlockSpec((tm, f_out_pad), lambda i, r, k: (i, 0)),
            scratch_shapes=[pltpu.VMEM((tm, f_in_pad), jnp.float32),   # K acc
                            pltpu.VMEM((tm, f_out_pad), jnp.float32)], # R acc
        ),
        compiler_params=pltpu.CompilerParams(
            dimension_semantics=("parallel", "arbitrary", "arbitrary"),
            vmem_limit_bytes=vmem_limit),
    )(*args)


# ------------------------- parameter construction ------------------------- #
def _xavier_uniform(key, shape, gain):
    # Matches torch xavier_uniform_ for 2D/3D tensors.
    rf = 1
    for d in shape[2:]:
        rf *= d
    fan_in, fan_out = shape[1] * rf, shape[0] * rf
    bound = gain * (6.0 / (fan_in + fan_out)) ** 0.5
    return jax.random.uniform(key, shape, jnp.float32, -bound, bound)


def _pad_weight(w, f_in_pad, f_out_pad):
    R, fi, fo = w.shape
    out = jnp.zeros((R, f_in_pad, f_out_pad), jnp.float32)
    return out.at[:, :fi, :fo].set(w).astype(jnp.bfloat16)


class EntityClassifyPallas:
    """JAX/Pallas mirror of EntityClassify (forward only, deterministic init)."""

    def __init__(self, key, h_dim, out_dim, num_rels, num_bases,
                 num_hidden_layers=1):
        gain = 2.0 ** 0.5                       # calculate_gain('relu')
        if num_bases < 0 or num_bases > num_rels:
            num_bases = num_rels
        use_basis = num_bases < num_rels
        self.num_rels = num_rels
        self.h_dim = h_dim
        self.out_dim = out_dim
        self.layers = []

        # Layer 0: weight=False, bias=True, activation=relu (no W input at all).
        self.layers.append(dict(
            use_weight=False, apply_relu=True, f_in=h_dim, f_out=h_dim,
            w=None, w_f32=None,
            b=jnp.zeros((1, _pad_feature_dim(h_dim)), jnp.float32),   # zeros_
            b_f32=jnp.zeros((h_dim,), jnp.float32),
        ))

        dims = [(h_dim, h_dim)] * num_hidden_layers + [(h_dim, out_dim)]
        acts = [True] * num_hidden_layers + [False]
        for (fi, fo), relu in zip(dims, acts):
            key, k1, k2 = jax.random.split(key, 3)
            if use_basis:
                basis = _xavier_uniform(k1, (num_bases, fi, fo), gain)
                w_comp = _xavier_uniform(k2, (num_rels, num_bases), gain)
                w_f32 = jnp.einsum('rb,bio->rio', w_comp, basis)      # WeightBasis
            else:
                w_f32 = _xavier_uniform(k1, (num_rels, fi, fo), gain)
            self.layers.append(dict(
                use_weight=True, apply_relu=relu, f_in=fi, f_out=fo,
                w=_pad_weight(w_f32, _pad_feature_dim(fi), _pad_feature_dim(fo)),
                w_f32=w_f32,
                b=jnp.zeros((1, _pad_feature_dim(fo)), jnp.float32),
                b_f32=jnp.zeros((fo,), jnp.float32),
            ))
        # TODO(synk): self_loop / dropout paths (module defaults = off) not implemented.

    # ---- input prep shared by the kernel path and the mirrored reference ---- #
    def _prepare(self, h, blocks, force_tk=None):
        n = h.shape[0]
        f_in_pad = _pad_feature_dim(self.h_dim)
        f_out_pad = _pad_feature_dim(max(self.h_dim, self.out_dim))
        n_pad, tm, tk, vmem_limit = _choose_tiling(
            n, f_in_pad, f_out_pad, self.num_rels, 4, force_tk=force_tk)
        x = jnp.zeros((n_pad, f_in_pad), jnp.float32)
        x = x.at[:n, :self.h_dim].set(h)
        x = x.at[:, self.h_dim].set(1.0)        # implicit degree ("ones") column
        x = x.astype(jnp.bfloat16)
        blocks_p = []
        for a in blocks:
            R, rows, cols = a.shape
            ap = jnp.zeros((R, n_pad, n_pad), jnp.float32)
            ap = ap.at[:, :rows, :cols].set(a)
            blocks_p.append(ap.astype(jnp.int8))   # 0/1 adjacency, 1 byte/elem
        return x, blocks_p, n_pad, tm, tk, vmem_limit

    def forward(self, h, blocks, force_tk=None):
        x, blocks_p, _, tm, tk, vmem_limit = self._prepare(h, blocks, force_tk)
        n = h.shape[0]
        for li, (p, a) in enumerate(zip(self.layers, blocks_p)):
            last = li == len(self.layers) - 1
            x = rgcn_layer(a, x, p['w'], p['b'],
                           use_weight=p['use_weight'], apply_relu=p['apply_relu'],
                           f_in=p['f_in'], f_out=p['f_out'],
                           out_dtype=jnp.float32 if last else jnp.bfloat16,
                           tm=tm, tk=tk, vmem_limit=vmem_limit)
        return x[:n, :self.out_dim]

    # --------------------------- pure-JAX references -------------------------- #
    def forward_ref(self, h, blocks, force_tk=None):
        """Reference mirroring the kernel's bf16/f32 precision choices."""
        x, blocks_p, _, _, _, _ = self._prepare(h, blocks, force_tk)
        n = h.shape[0]
        for li, (p, a_i8) in enumerate(zip(self.layers, blocks_p)):
            last = li == len(self.layers) - 1
            a = a_i8.astype(jnp.bfloat16)
            m = jnp.einsum('rij,jf->rif', a, x,
                           preferred_element_type=jnp.float32)
            deg = jnp.maximum(a_i8.astype(jnp.float32).sum(-1, keepdims=True), 1.0)
            msg = m * (1.0 / deg)
            if p['use_weight']:
                msg = jnp.einsum('rnf,rfo->rno', msg.astype(jnp.bfloat16),
                                 p['w'], preferred_element_type=jnp.float32)
            hh = msg.sum(0) + p['b']
            if p['apply_relu']:
                hh = jnp.maximum(hh, 0.0)
            col = jnp.arange(hh.shape[-1])
            hh = jnp.where(col == p['f_out'], 1.0,
                           jnp.where(col > p['f_out'], 0.0, hh))
            x = hh.astype(jnp.float32 if last else jnp.bfloat16)
        return x[:n, :self.out_dim]

    def forward_ref_f32(self, h, blocks):
        """Original-module math in pure f32 (no padding, no bf16)."""
        x = h
        for p, a in zip(self.layers, blocks):
            deg = jnp.maximum(a.sum(-1, keepdims=True), 1.0)
            msg = jnp.einsum('rij,jf->rif', a, x) / deg
            if p['use_weight']:
                msg = jnp.einsum('rnf,rfo->rno', msg, p['w_f32'])
            x = msg.sum(0) + p['b_f32']
            if p['apply_relu']:
                x = jnp.maximum(x, 0.0)
        return x


# ---------------------------------- main ----------------------------------- #
if __name__ == "__main__":
    N, H_DIM, OUT_DIM = 64, 32, 16
    NUM_RELS, NUM_BASES, NUM_HIDDEN = 3, 2, 1   # -> 3 layers total

    key = jax.random.PRNGKey(0)
    key, k_feat, k_model = jax.random.split(key, 3)

    # Node features.
    h0 = jax.random.normal(k_feat, (N, H_DIM), jnp.float32)

    # Per-layer relation adjacency stacks (dense 0/1, ~20% edges).
    blocks = []
    for _ in range(NUM_HIDDEN + 2):
        key, k_a = jax.random.split(key)
        a = (jax.random.uniform(k_a, (NUM_RELS, N, N)) < 0.2).astype(jnp.float32)
        blocks.append(a)

    model = EntityClassifyPallas(k_model, H_DIM, OUT_DIM, NUM_RELS, NUM_BASES,
                                 num_hidden_layers=NUM_HIDDEN)

    out = jax.block_until_ready(model.forward(h0, blocks))
    assert out.shape == (N, OUT_DIM), out.shape

    # Check 1: vs a reference mirroring the kernel's precision choices
    # (exact reciprocal in the ref vs EUP approx in the kernel -> loose tol).
    ref = model.forward_ref(h0, blocks)
    err = float(jnp.max(jnp.abs(out - ref)))
    assert jnp.allclose(out, ref, rtol=1e-2, atol=1e-2), err

    # Check 2: vs the original module's math in pure f32 (bf16-level tolerance).
    ref32 = model.forward_ref_f32(h0, blocks)
    err32 = float(jnp.max(jnp.abs(out - ref32)))
    assert jnp.allclose(out, ref32, rtol=5e-2, atol=5e-2), err32

    # Check 3: exercise the K-tiled path (X not VMEM-resident, multiple k
    # tiles + multiple row tiles) that is used for large graphs on real HW.
    N2 = 320
    key, k_f2 = jax.random.split(key)
    h2 = jax.random.normal(k_f2, (N2, H_DIM), jnp.float32)
    blocks2 = []
    for _ in range(NUM_HIDDEN + 2):
        key, k_a = jax.random.split(key)
        a = (jax.random.uniform(k_a, (NUM_RELS, N2, N2)) < 0.1).astype(jnp.float32)
        blocks2.append(a)
    out2 = jax.block_until_ready(model.forward(h2, blocks2, force_tk=128))
    ref2 = model.forward_ref(h2, blocks2)
    err2 = float(jnp.max(jnp.abs(out2 - ref2)))
    assert out2.shape == (N2, OUT_DIM), out2.shape
    assert jnp.allclose(out2, ref2, rtol=1e-2, atol=1e-2), err2

    print("KERNEL_OK")
</pallas_src>

<mosaic_0001>
module attributes {stable_mosaic.version = 11 : i64} {
  func.func @_rgcn_layer_kernel(%arg0: i32, %arg1: i32, %arg2: i32, %arg3: memref<1x64x128xi8, #tpu.memory_space<vmem>>, %arg4: memref<128x128xbf16, #tpu.memory_space<vmem>>, %arg5: memref<1x128xf32, #tpu.memory_space<vmem>>, %arg6: memref<64x128xbf16, #tpu.memory_space<vmem>>, %arg7: memref<64x128xf32, #tpu.memory_space<vmem>>, %arg8: memref<64x128xf32, #tpu.memory_space<vmem>>) attributes {dimension_semantics = [#tpu.dimension_semantics<parallel>, #tpu.dimension_semantics<arbitrary>, #tpu.dimension_semantics<arbitrary>], iteration_bounds = array<i64: 2, 3, 1>, scalar_prefetch = 0 : i64, scratch_operands = 2 : i64, tpu.core_type = #tpu.core_type<tc>, window_params = [{transform_indices = @transform_0, window_bounds = array<i64: 1, 64, 128>}, {transform_indices = @transform_1, window_bounds = array<i64: 128, 128>}, {pipeline_mode = #tpu.pipeline_mode<synchronous>, transform_indices = @transform_2, window_bounds = array<i64: 1, 128>}, {transform_indices = @transform_3, window_bounds = array<i64: 64, 128>}]} {
    %c0 = arith.constant 0 : index
    %c0_0 = arith.constant 0 : index
    %c0_1 = arith.constant 0 : index
    %0 = vector.load %arg3[%c0, %c0_0, %c0_1] : memref<1x64x128xi8, #tpu.memory_space<vmem>>, vector<1x64x128xi8>
    %1 = vector.shape_cast %0 : vector<1x64x128xi8> to vector<64x128xi8>
    %2 = arith.sitofp %1 : vector<64x128xi8> to vector<64x128xbf16>
    %c0_2 = arith.constant 0 : index
    %c0_3 = arith.constant 0 : index
    %3 = vector.load %arg4[%c0_2, %c0_3] : memref<128x128xbf16, #tpu.memory_space<vmem>>, vector<128x128xbf16>
    %cst = arith.constant dense<0.000000e+00> : vector<64x128xf32>
    %4 = tpu.matmul %2, %3, %cst {dimension_numbers = #tpu.dot_dimension_numbers<[1], [0], [0], [1], [0, 0, 1, 1], [], []>} : vector<64x128xbf16>, vector<128x128xbf16>, vector<64x128xf32> -> vector<64x128xf32>
    %c0_i32 = arith.constant 0 : i32
    %5 = arith.cmpi eq, %arg2, %c0_i32 : i32
    %6 = arith.extui %5 : i1 to i32
    %c0_i32_4 = arith.constant 0 : i32
    %7 = arith.cmpi ne, %6, %c0_i32_4 : i32
    scf.if %7 {
      %c0_9 = arith.constant 0 : index
      %c0_10 = arith.constant 0 : index
      %14 = vector.load %arg7[%c0_9, %c0_10] : memref<64x128xf32, #tpu.memory_space<vmem>>, vector<64x128xf32>
      tpu.vector_store %arg7[%c0_9, %c0_10], %4 {strides = array<i32>} : memref<64x128xf32, #tpu.memory_space<vmem>>, vector<64x128xf32>,
    } else {
    }
    %c0_i32_5 = arith.constant 0 : i32
    %8 = arith.cmpi sgt, %arg2, %c0_i32_5 : i32
    %9 = arith.extui %8 : i1 to i32
    %c0_i32_6 = arith.constant 0 : i32
    %10 = arith.cmpi ne, %9, %c0_i32_6 : i32
    scf.if %10 {
      %c0_9 = arith.constant 0 : index
      %c0_10 = arith.constant 0 : index
      %14 = vector.load %arg7[%c0_9, %c0_10] : memref<64x128xf32, #tpu.memory_space<vmem>>, vector<64x128xf32>
      %15 = arith.addf %14, %4 : vector<64x128xf32>
      %c0_11 = arith.constant 0 : index
      %c0_12 = arith.constant 0 : index
      %16 = vector.load %arg7[%c0_11, %c0_12] : memref<64x128xf32, #tpu.memory_space<vmem>>, vector<64x128xf32>
      tpu.vector_store %arg7[%c0_11, %c0_12], %15 {strides = array<i32>} : memref<64x128xf32, #tpu.memory_space<vmem>>, vector<64x128xf32>,
    } else {
    }
    %c0_i32_7 = arith.constant 0 : i32
    %11 = arith.cmpi eq, %arg2, %c0_i32_7 : i32
    %12 = arith.extui %11 : i1 to i32
    %c0_i32_8 = arith.constant 0 : i32
    %13 = arith.cmpi ne, %12, %c0_i32_8 : i32
    scf.if %13 {
      %c0_9 = arith.constant 0 : index
      %c0_10 = arith.constant 0 : index
      %14 = vector.load %arg7[%c0_9, %c0_10] : memref<64x128xf32, #tpu.memory_space<vmem>>, vector<64x128xf32>
      %15 = vector.extract_strided_slice %14 {offsets = [0, 32], sizes = [64, 1], strides = [1, 1]} : vector<64x128xf32> to vector<64x1xf32>
      %cst_11 = arith.constant 1.000000e+00 : f32
      %16 = vector.broadcast %cst_11 : f32 to vector<64x1xf32>
      %17 = arith.maximumf %15, %16 : vector<64x1xf32>
      %18 = tpu.reciprocal %17 {approx = true} : vector<64x1xf32> -> vector<64x1xf32>
      %19 = vector.broadcast %18 : vector<64x1xf32> to vector<64x128xf32>
      %20 = arith.mulf %14, %19 : vector<64x128xf32>
      %c0_i32_12 = arith.constant 0 : i32
      %21 = arith.cmpi eq, %arg1, %c0_i32_12 : i32
      %22 = arith.extui %21 : i1 to i32
      %c0_i32_13 = arith.constant 0 : i32
      %23 = arith.cmpi ne, %22, %c0_i32_13 : i32
      scf.if %23 {
        %c0_17 = arith.constant 0 : index
        %c0_18 = arith.constant 0 : index
        %30 = vector.load %arg8[%c0_17, %c0_18] : memref<64x128xf32, #tpu.memory_space<vmem>>, vector<64x128xf32>
        tpu.vector_store %arg8[%c0_17, %c0_18], %20 {strides = array<i32>} : memref<64x128xf32, #tpu.memory_space<vmem>>, vector<64x128xf32>,
      } else {
      }
      %c0_i32_14 = arith.constant 0 : i32
      %24 = arith.cmpi sgt, %arg1, %c0_i32_14 : i32
      %25 = arith.extui %24 : i1 to i32
      %c0_i32_15 = arith.constant 0 : i32
      %26 = arith.cmpi ne, %25, %c0_i32_15 : i32
      scf.if %26 {
        %c0_17 = arith.constant 0 : index
        %c0_18 = arith.constant 0 : index
        %30 = vector.load %arg8[%c0_17, %c0_18] : memref<64x128xf32, #tpu.memory_space<vmem>>, vector<64x128xf32>
        %31 = arith.addf %30, %20 : vector<64x128xf32>
        %c0_19 = arith.constant 0 : index
        %c0_20 = arith.constant 0 : index
        %32 = vector.load %arg8[%c0_19, %c0_20] : memref<64x128xf32, #tpu.memory_space<vmem>>, vector<64x128xf32>
        tpu.vector_store %arg8[%c0_19, %c0_20], %31 {strides = array<i32>} : memref<64x128xf32, #tpu.memory_space<vmem>>, vector<64x128xf32>,
      } else {
      }
      %c2_i32 = arith.constant 2 : i32
      %27 = arith.cmpi eq, %arg1, %c2_i32 : i32
      %28 = arith.extui %27 : i1 to i32
      %c0_i32_16 = arith.constant 0 : i32
      %29 = arith.cmpi ne, %28, %c0_i32_16 : i32
      scf.if %29 {
        %c0_17 = arith.constant 0 : index
        %c0_18 = arith.constant 0 : index
        %30 = vector.load %arg8[%c0_17, %c0_18] : memref<64x128xf32, #tpu.memory_space<vmem>>, vector<64x128xf32>
        %c0_19 = arith.constant 0 : index
        %c0_20 = arith.constant 0 : index
        %31 = vector.load %arg5[%c0_19, %c0_20] : memref<1x128xf32, #tpu.memory_space<vmem>>, vector<1x128xf32>
        %32 = vector.broadcast %31 : vector<1x128xf32> to vector<64x128xf32>
        %33 = arith.addf %30, %32 : vector<64x128xf32>
        %cst_21 = arith.constant 0.000000e+00 : f32
        %34 = vector.broadcast %cst_21 : f32 to vector<64x128xf32>
        %35 = arith.maximumf %33, %34 : vector<64x128xf32>
        %36 = tpu.iota {dimensions = array<i32: 1>} : vector<64x128xi32>
        %c32_i32 = arith.constant 32 : i32
        %37 = vector.broadcast %c32_i32 : i32 to vector<64x128xi32>
        %38 = arith.cmpi eq, %36, %37 : vector<64x128xi32>
        %c32_i32_22 = arith.constant 32 : i32
        %39 = vector.broadcast %c32_i32_22 : i32 to vector<64x128xi32>
        %40 = arith.cmpi sgt, %36, %39 : vector<64x128xi32>
        %cst_23 = arith.constant 0.000000e+00 : f32
        %41 = vector.broadcast %cst_23 : f32 to vector<64x128xf32>
        %42 = arith.select %40, %41, %35 : vector<64x128xi1>, vector<64x128xf32>
        %cst_24 = arith.constant 1.000000e+00 : f32
        %43 = vector.broadcast %cst_24 : f32 to vector<64x128xf32>
        %44 = arith.select %38, %43, %42 : vector<64x128xi1>, vector<64x128xf32>
        %45 = arith.truncf %44 : vector<64x128xf32> to vector<64x128xbf16>
        %c0_25 = arith.constant 0 : index
        %c0_26 = arith.constant 0 : index
        %46 = vector.load %arg6[%c0_25, %c0_26] : memref<64x128xbf16, #tpu.memory_space<vmem>>, vector<64x128xbf16>
        tpu.vector_store %arg6[%c0_25, %c0_26], %45 {strides = array<i32>} : memref<64x128xbf16, #tpu.memory_space<vmem>>, vector<64x128xbf16>,
      } else {
      }
    } else {
    }
    return
  }
  func.func @transform_0(%arg0: i32, %arg1: i32, %arg2: i32) -> (i32, i32, i32) {
    %c0_i32 = arith.constant 0 : i32
    return %arg1, %arg0, %arg2 : i32, i32, i32
  }
  func.func @transform_1(%arg0: i32, %arg1: i32, %arg2: i32) -> (i32, i32) {
    %c0_i32 = arith.constant 0 : i32
    %c0_i32_0 = arith.constant 0 : i32
    return %arg2, %c0_i32 : i32, i32
  }
  func.func @transform_2(%arg0: i32, %arg1: i32, %arg2: i32) -> (i32, i32) {
    %c0_i32 = arith.constant 0 : i32
    %c0_i32_0 = arith.constant 0 : i32
    %c0_i32_1 = arith.constant 0 : i32
    return %c0_i32, %c0_i32_0 : i32, i32
  }
  func.func @transform_3(%arg0: i32, %arg1: i32, %arg2: i32) -> (i32, i32) {
    %c0_i32 = arith.constant 0 : i32
    %c0_i32_0 = arith.constant 0 : i32
    return %arg0, %c0_i32 : i32, i32
  }
}

</mosaic_0001>

<llo_original>
// kernel: tpu_custom_call.1
$region0: #{tpu_custom_call.1}
  #allocation0 [shape = 'u32[]', space=smem, size = 0x4, offset = 0x4, fixed_abs, tag = 'smem constant byte address 0x4 - core index']
  #allocation1 [shape = 'u32[144,128]{1,0:T(1,128)}', space=vmem, size = 0x12000, scoped, tag = 'internal scratch']
  #allocation2 [shape = 'f32[64,128]{1,0:T(8,128)}', space=vmem, size = 0x8000, scoped, tag = 'scratch operand']
  #allocation3 [shape = 'f32[64,128]{1,0:T(8,128)}', space=vmem, size = 0x8000, scoped, tag = 'scratch operand']
  %s0 = inlined_call_operand.hbm [shape: s8[3,128,128], index: 0, kind: input, shape index: {}]
  %s1 = inlined_call_operand.hbm [shape: bf16[128,128], index: 1, kind: input, shape index: {}]
  %s2 = inlined_call_operand.vmem [shape: f32[1,128], index: 2, kind: input, shape index: {}]
  %s3 = inlined_call_operand.hbm [shape: bf16[128,128], index: 3, kind: output, shape index: {}]
  %s4 = sld [smem:[#allocation0]]
  $region77: #{tpu_custom_call.1} parent=0
    _
  %s6 = ssub.s32 1, %s4
  %s7 = scalar_select 0, %s6, %s4
  $region1: #{tpu_custom_call.1} parent=0
    #allocation4 [shape = 'u8[16384]{0}', space=vmem, size = 0x4000, scoped, tag = 'input window, operand 0']
    #allocation5 [shape = 's32[2]{0}', space=sflag, size = 0x8, scoped, tag = 'scoped memory for tpu_custom_call.1']
    #allocation6 [shape = 's32[2]{0}', space=sflag, size = 0x8, scoped, tag = 'scoped memory for tpu_custom_call.1']
    #allocation7 [shape = 'u8[32768]{0}', space=vmem, size = 0x8000, scoped, tag = 'input window, operand 1, single buffered']
    #allocation8 [shape = 's32[1]{0}', space=sflag, size = 0x4, scoped, tag = 'scoped memory for tpu_custom_call.1']
    #allocation9 [shape = 'u8[32768]{0}', space=vmem, size = 0x8000, scoped, tag = 'output window, operand 0']
    %8 = vsyncpa [#allocation5], 0
    %s9 = scalar_lea.sflag [#allocation5], 1
    %10 = vsyncpa %s9, 0
    %11 = vsyncpa [#allocation8], 0
    %12 = vsyncpa [#allocation6], 0
    %s13 = scalar_lea.sflag [#allocation6], 1
    %14 = vsyncpa %s13, 0
    loop: start=0, step=1, limit=8
    $region2: #{tpu_custom_call.1} parent=1 // loop_pre_header
      _
    $region3: #{tpu_custom_call.1} parent=1 // loop_header
      %s16 = sphi 0, %s20
      %p17 = scmp.ge.s32.totalorder %s16, 8
      %s23 = sphi 0, %s42
      %s24 = sphi 0, %s38
      %s25 = sphi 0, %s34
      %s26 = sphi 0, %s23
      %s27 = sphi 0, %s24
      %s28 = sphi 0, %s25
      %s29 = sphi 0, %s26
      %s30 = sphi 0, %s27
      %s31 = sphi 0, %s28
      %s49 = sphi 0, %s51
      %s52 = sphi 0, %s49
      %s53 = sphi 0, %s52
      %s69 = sphi 0, %s53
      %s75 = sphi 0, %s77
      %s78 = sphi 0, %s75
      %s79 = sphi 0, %s78
      %s95 = sphi 0, %s79
      %s99 = sphi 0, %s99
      %s101 = sphi 0, %s99
      %s102 = sphi 0, %s101
      %s116 = sphi 0, %s102
      %s122 = sphi 0, %s124
      %s125 = sphi 0, %s122
      %s126 = sphi 0, %s125
      %s142 = sphi 0, %s126
    $region4: #{tpu_custom_call.1} parent=1 // loop_header_branch
      %19 = sbr.rel (%p17) target = $region8
    $region5: #{tpu_custom_call.1} parent=1 // loop_body
      %s21 = ssub.s32 %s16, 1
      %s22 = ssub.s32 %s16, 2
      %s32 = sadd.s32 1, %s25
      %p33 = scmp.ge.s32.totalorder %s32, 1
      %s34 = scalar_select %p33, 0, %s32
      %s35 = sadd.s32 1, %s24
      %s36 = scalar_select %p33, %s35, %s24
      %p37 = scmp.ge.s32.totalorder %s36, 3
      %s38 = scalar_select %p37, 0, %s36
      %s39 = sadd.s32 1, %s23
      %s40 = scalar_select %p37, %s39, %s23
      %p41 = scmp.ge.s32.totalorder %s40, 2
      %s42 = scalar_select %p41, 0, %s40
      %s43 = ssub.s32 %s24, %s38
      %s44 = ssub.s32 %s23, %s42
      %s45 = sor.u32 %s43, %s44
      %s46 = ssub.s32 %s25, %s34
      %s47 = sor.u32 %s45, %s46
      %p48 = scmp.eq.s32.totalorder %s47, 0
      %s50 = sadd.s32 %s49, 1
      %s51 = scalar_select %p48, %s49, %s50
      %p54 = pneg %p48
      %p55 = scmp.eq.s32.totalorder %s16, 5
      %p56 = por %p54, %p55
      %p57 = scmp.ne.s32.totalorder %s49, %s52
      %p58 = scmp.eq.s32.totalorder %s16, 0
      %p59 = por %p57, %p58
      %p60 = scmp.ne.s32.totalorder %s49, %s52
      %p61 = scmp.eq.s32.totalorder %s21, 5
      %p62 = por %p60, %p61
      %p63 = scmp.ne.s32.totalorder %s52, %s53
      %p64 = scmp.eq.s32.totalorder %s21, 0
      %p65 = por %p63, %p64
      %p66 = scmp.ne.s32.totalorder %s52, %s53
      %p67 = scmp.eq.s32.totalorder %s22, 5
      %p68 = por %p66, %p67
      %p70 = scmp.ne.s32.totalorder %s53, %s69
      %p71 = scmp.eq.s32.totalorder %s22, 0
      %p72 = por %p70, %p71
      %s73 = ssub.s32 %s25, %s34
      %p74 = scmp.eq.s32.totalorder %s73, 0
      %s76 = sadd.s32 %s75, 1
      %s77 = scalar_select %p74, %s75, %s76
      %p80 = pneg %p74
      %p81 = scmp.eq.s32.totalorder %s16, 5
      %p82 = por %p80, %p81
      %p83 = scmp.ne.s32.totalorder %s75, %s78
      %p84 = scmp.eq.s32.totalorder %s16, 0
      %p85 = por %p83, %p84
      %p86 = scmp.ne.s32.totalorder %s75, %s78
      %p87 = scmp.eq.s32.totalorder %s21, 5
      %p88 = por %p86, %p87
      %p89 = scmp.ne.s32.totalorder %s78, %s79
      %p90 = scmp.eq.s32.totalorder %s21, 0
      %p91 = por %p89, %p90
      %p92 = scmp.ne.s32.totalorder %s78, %s79
      %p93 = scmp.eq.s32.totalorder %s22, 5
      %p94 = por %p92, %p93
      %p96 = scmp.ne.s32.totalorder %s79, %s95
      %p97 = scmp.eq.s32.totalorder %s22, 0
      %p98 = por %p96, %p97
      %s100 = sadd.s32 %s99, 1
      %p103 = scmp.eq.s32.totalorder %s16, 5
      %p104 = scmp.ne.s32.totalorder %s99, %s101
      %p105 = scmp.eq.s32.totalorder %s16, 0
      %p106 = por %p104, %p105
      %p107 = scmp.ne.s32.totalorder %s99, %s101
      %p108 = scmp.eq.s32.totalorder %s21, 5
      %p109 = por %p107, %p108
      %p110 = scmp.ne.s32.totalorder %s101, %s102
      %p111 = scmp.eq.s32.totalorder %s21, 0
      %p112 = por %p110, %p111
      %p113 = scmp.ne.s32.totalorder %s101, %s102
      %p114 = scmp.eq.s32.totalorder %s22, 5
      %p115 = por %p113, %p114
      %p117 = scmp.ne.s32.totalorder %s102, %s116
      %p118 = scmp.eq.s32.totalorder %s22, 0
      %p119 = por %p117, %p118
      %s120 = ssub.s32 %s23, %s42
      %p121 = scmp.eq.s32.totalorder %s120, 0
      %s123 = sadd.s32 %s122, 1
      %s124 = scalar_select %p121, %s122, %s123
      %p127 = pneg %p121
      %p128 = scmp.eq.s32.totalorder %s16, 5
      %p129 = por %p127, %p128
      %p130 = scmp.ne.s32.totalorder %s122, %s125
      %p131 = scmp.eq.s32.totalorder %s16, 0
      %p132 = por %p130, %p131
      %p133 = scmp.ne.s32.totalorder %s122, %s125
      %p134 = scmp.eq.s32.totalorder %s21, 5
      %p135 = por %p133, %p134
      %p136 = scmp.ne.s32.totalorder %s125, %s126
      %p137 = scmp.eq.s32.totalorder %s21, 0
      %p138 = por %p136, %p137
      %p139 = scmp.ne.s32.totalorder %s125, %s126
      %p140 = scmp.eq.s32.totalorder %s22, 5
      %p141 = por %p139, %p140
      %p143 = scmp.ne.s32.totalorder %s126, %s142
      %p144 = scmp.eq.s32.totalorder %s22, 0
      %p145 = por %p143, %p144
      %p146 = scmp.le.s32.totalorder 1, %s16
      %p147 = scmp.lt.s32.totalorder %s16, 7
      %p148 = pnand %p146, %p147
      %p149 = pneg %p148
      // Predicated region
      $region9: #{tpu_custom_call.1} parent=5 // pred_check
        _
      $region10: #{tpu_custom_call.1} parent=5 // pred_check_branch
        %151 = sbr.rel (%p148) target = $region12
      $region11: #{tpu_custom_call.1} parent=5 // pred_region
        %s152 = ssub.s32 %s16, 1
        // Predicated region
        $region13: #{tpu_custom_call.1} parent=11 // pred_check
          %p153 = pneg %p91
        $region14: #{tpu_custom_call.1} parent=11 // pred_check_branch
          %155 = sbr.rel (%p153) target = $region16
        $region15: #{tpu_custom_call.1} parent=11 // pred_region
          %s156 = smul.u32 16, %s28
          %s158 = ssub.s32 1024, 1024
          %159 = vsyncadd [#allocation8], %s158
          %s160 = smul.addr %s156, 64
          %s161 = scalar_lea.hbm %s1, %s160
          %s162 = sshll.u32 [#allocation7], 4
          %s163 = int_to_ptr.vmem [resolvable:$true] %s162
          %168 = dma.hbm_to_vmem [thread:$0]  %s161, 1024, %s163, [#allocation8], 64, 64, 4
        $region16: #{tpu_custom_call.1} parent=11 // pred_fallthru
          _
        // Predicated region
        $region17: #{tpu_custom_call.1} parent=11 // pred_check
          %p169 = pneg %p112
        $region18: #{tpu_custom_call.1} parent=11 // pred_check_branch
          %171 = sbr.rel (%p169) target = $region20
        $region19: #{tpu_custom_call.1} parent=11 // pred_region
          _
        $region20: #{tpu_custom_call.1} parent=11 // pred_fallthru
          _
      $region12: #{tpu_custom_call.1} parent=5 // pred_fallthru
        _
      %p172 = scmp.lt.s32.totalorder %s16, 6
      // Predicated region
      $region21: #{tpu_custom_call.1} parent=5 // pred_check
        %p173 = pneg %p172
      $region22: #{tpu_custom_call.1} parent=5 // pred_check_branch
        %175 = sbr.rel (%p173) target = $region24
      $region23: #{tpu_custom_call.1} parent=5 // pred_region
        // Predicated region
        $region25: #{tpu_custom_call.1} parent=23 // pred_check
          %p176 = pneg %p59
        $region26: #{tpu_custom_call.1} parent=23 // pred_check_branch
          %178 = sbr.rel (%p176) target = $region28
        $region27: #{tpu_custom_call.1} parent=23 // pred_region
          %s179 = sand.u32 %s49, 1
          %s180 = scalar_lea.sflag [#allocation5], %s179
          %s181 = sand.u32 %s49, 1
          %s182 = smul.addr %s181, 16
          %s183 = scalar_lea.vmem [#allocation4], %s182
          %s184 = smul.u32 2, %s23
          %s186 = ssub.s32 256, 256
          %187 = vsyncadd %s180, %s186
          %s188 = sadd.s32 %s25, %s184
          %s189 = smul.addr %s24, 4
          %s190 = sadd.s32 %s188, %s189
          %s191 = smul.addr %s190, 128
          %s192 = scalar_lea.hbm %s0, %s191
          %s193 = sshll.u32 %s183, 4
          %s194 = int_to_ptr.vmem [resolvable:$true] %s193
          %199 = dma.hbm_to_vmem [thread:$0]  %s192, 256, %s194, %s180, 128, 128, 8
        $region28: #{tpu_custom_call.1} parent=23 // pred_fallthru
          _
      $region24: #{tpu_custom_call.1} parent=5 // pred_fallthru
        _
      %p200 = scmp.le.s32.totalorder 1, %s16
      %p201 = scmp.lt.s32.totalorder %s16, 7
      %p202 = pnand %p200, %p201
      %p203 = pneg %p202
      // Predicated region
      $region29: #{tpu_custom_call.1} parent=5 // pred_check
        _
      $region30: #{tpu_custom_call.1} parent=5 // pred_check_branch
        %205 = sbr.rel (%p202) target = $region32
      $region31: #{tpu_custom_call.1} parent=5 // pred_region
        %s206 = ssub.s32 %s16, 1
        %s207 = sand.u32 %s52, 1
        %s208 = scalar_lea.sflag [#allocation5], %s207
        %s209 = sand.u32 %s52, 1
        %s210 = smul.addr %s209, 16
        %s211 = scalar_lea.vmem [#allocation4], %s210
        // Predicated region
        $region33: #{tpu_custom_call.1} parent=31 // pred_check
          %p212 = pneg %p65
        $region34: #{tpu_custom_call.1} parent=31 // pred_check_branch
          %214 = sbr.rel (%p212) target = $region36
        $region35: #{tpu_custom_call.1} parent=31 // pred_region
          %215 = dma.done %s208, 256
        $region36: #{tpu_custom_call.1} parent=31 // pred_fallthru
          _
        // Predicated region
        $region37: #{tpu_custom_call.1} parent=31 // pred_check
          %p216 = pneg %p91
        $region38: #{tpu_custom_call.1} parent=31 // pred_check_branch
          %218 = sbr.rel (%p216) target = $region40
        $region39: #{tpu_custom_call.1} parent=31 // pred_region
          %219 = dma.done [#allocation8], 1024
        $region40: #{tpu_custom_call.1} parent=31 // pred_fallthru
          _
        %s220 = sand.u32 %s52, 1
        %s221 = scalar_lea.sflag [#allocation5], %s220
        %s222 = sand.u32 %s52, 1
        %s223 = smul.addr %s222, 16
        %s224 = scalar_lea.vmem [#allocation4], %s223
        %p225 = pneg %p65
        %p226 = pneg %p62
        %p227 = pneg %p91
        %p228 = pneg %p88
        %p229 = pneg %p112
        %p230 = pneg %p109
        %p231 = pneg %p138
        %p232 = pneg %p135
        %s233 = sand.u32 %s125, 1
        %s234 = scalar_lea.sflag [#allocation6], %s233
        %s235 = sand.u32 %s125, 1
        %s236 = smul.addr %s235, 32
        %s237 = scalar_lea.vmem [#allocation9], %s236
        %s238 = smul.u32 2, %s26
        %s239 = smul.u32 16, %s28
        %s240 = smul.u32 8, %s26
        %v242 = vld [vmem:[%s211] sm:$0xff]
        %v243 = vld [vmem:[%s211 + $0x8] sm:$0xff]
        %v244 = vunpack.c.l.s8.bf16 %v242
        %v245 = vunpack.c.h.s8.bf16 %v242
        %v246 = vunpack.c.l.s8.bf16 %v243
        %v247 = vunpack.c.h.s8.bf16 %v243
        %v248 = vld [vmem:[#allocation7] sm:$0xf]
        %v249 = vld [vmem:[#allocation7 + $0x4] sm:$0xf]
        %v250 = vld [vmem:[#allocation7 + $0x8] sm:$0xf]
        %v251 = vld [vmem:[#allocation7 + $0xc] sm:$0xf]
        %v252 = vld [vmem:[#allocation7 + $0x10] sm:$0xf]
        %v253 = vld [vmem:[#allocation7 + $0x14] sm:$0xf]
        %v254 = vld [vmem:[#allocation7 + $0x18] sm:$0xf]
        %v255 = vld [vmem:[#allocation7 + $0x1c] sm:$0xf]
        %v256 = vld [vmem:[#allocation7 + $0x20] sm:$0xf]
        %v257 = vld [vmem:[#allocation7 + $0x24] sm:$0xf]
        %v258 = vld [vmem:[#allocation7 + $0x28] sm:$0xf]
        %v259 = vld [vmem:[#allocation7 + $0x2c] sm:$0xf]
        %v260 = vld [vmem:[#allocation7 + $0x30] sm:$0xf]
        %v261 = vld [vmem:[#allocation7 + $0x34] sm:$0xf]
        %v262 = vld [vmem:[#allocation7 + $0x38] sm:$0xf]
        %v263 = vld [vmem:[#allocation7 + $0x3c] sm:$0xf]
        %v280 = vunpack.c.l.b16 %v248
        %v281 = vunpack.c.l.b16 %v249
        %v282 = vunpack.c.l.b16 %v250
        %v283 = vunpack.c.l.b16 %v251
        %v284 = vunpack.c.l.b16 %v252
        %v285 = vunpack.c.l.b16 %v253
        %v286 = vunpack.c.l.b16 %v254
        %v287 = vunpack.c.l.b16 %v255
        %v288 = vunpack.c.l.b16 %v256
        %v289 = vunpack.c.l.b16 %v257
        %v290 = vunpack.c.l.b16 %v258
        %v291 = vunpack.c.l.b16 %v259
        %v292 = vunpack.c.l.b16 %v260
        %v293 = vunpack.c.l.b16 %v261
        %v294 = vunpack.c.l.b16 %v262
        %v295 = vunpack.c.l.b16 %v263
        %v296 = vpack.c.b16 %v281, %v280
        %v297 = vpack.c.b16 %v283, %v282
        %v298 = vpack.c.b16 %v285, %v284
        %v299 = vpack.c.b16 %v287, %v286
        %v300 = vpack.c.b16 %v289, %v288
        %v301 = vpack.c.b16 %v291, %v290
        %v302 = vpack.c.b16 %v293, %v292
        %v303 = vpack.c.b16 %v295, %v294
        %312 = vmatprep.subr.bf16.mxu0 0
        %313 = vmatpush1.bf16.msra.mxu0 %v303
        %314 = vmatprep.subr.bf16.mxu0 0
        %315 = vmatpush1.bf16.msra.mxu0 %v302
        %316 = vmatprep.subr.bf16.mxu0 0
        %317 = vmatpush1.bf16.msra.mxu0 %v301
        %318 = vmatprep.subr.bf16.mxu0 0
        %319 = vmatpush1.bf16.msra.mxu0 %v300
        %320 = vmatprep.subr.bf16.mxu0 0
        %321 = vmatpush1.bf16.msra.mxu0 %v299
        %322 = vmatprep.subr.bf16.mxu0 0
        %323 = vmatpush1.bf16.msra.mxu0 %v298
        %324 = vmatprep.subr.bf16.mxu0 0
        %325 = vmatpush1.bf16.msra.mxu0 %v297
        %326 = vmatprep.subr.bf16.mxu0 0
        %327 = vmatpush1.bf16.msra.mxu0 %v296
        %328 = vmatprep.subr.bf16.mxu0 0
        %329 = vmatpush2.bf16.msra.mxu0 0
        %330 = vmatprep.subr.bf16.mxu0 0
        %331 = vmatpush2.bf16.msra.mxu0 0
        %332 = vmatprep.subr.bf16.mxu0 0
        %333 = vmatpush2.bf16.msra.mxu0 0
        %334 = vmatprep.subr.bf16.mxu0 0
        %335 = vmatpush2.bf16.msra.mxu0 0
        %336 = vmatprep.subr.bf16.mxu0 0
        %337 = vmatpush2.bf16.msra.mxu0 0
        %338 = vmatprep.subr.bf16.mxu0 0
        %339 = vmatpush2.bf16.msra.mxu0 0
        %340 = vmatprep.subr.bf16.mxu0 0
        %341 = vmatpush2.bf16.msra.mxu0 0
        %342 = vmatprep.subr.bf16.mxu0 0
        %343 = vmatpush2.bf16.msra.mxu0 0
        %344 = vmatprep.mubr.bf16.mxu0 0
        %345 = vmatmul.mubr.bf16.gmra.mxu0 %v244
        %v346 = vpop.f32.mrf.mxu0
        %v347 = vadd.f32 0.0, %v346
        %v348 = vpop.f32.mrf.mxu0
        %v349 = vpop.f32.mrf.mxu0
        %v350 = vadd.f32 0.0, %v349
        %v351 = vpop.f32.mrf.mxu0
        %352 = vmatprep.mubr.bf16.mxu0 0
        %353 = vmatmul.mubr.bf16.gmra.mxu0 %v245
        %v354 = vpop.f32.mrf.mxu0
        %v355 = vadd.f32 0.0, %v354
        %v356 = vpop.f32.mrf.mxu0
        %v357 = vpop.f32.mrf.mxu0
        %v358 = vadd.f32 0.0, %v357
        %v359 = vpop.f32.mrf.mxu0
        %360 = vmatprep.mubr.bf16.mxu0 0
        %361 = vmatmul.mubr.bf16.gmra.mxu0 %v246
        %v362 = vpop.f32.mrf.mxu0
        %v363 = vadd.f32 0.0, %v362
        %v364 = vpop.f32.mrf.mxu0
        %v365 = vpop.f32.mrf.mxu0
        %v366 = vadd.f32 0.0, %v365
        %v367 = vpop.f32.mrf.mxu0
        %368 = vmatprep.mubr.bf16.mxu0 0
        %369 = vmatmul.mubr.bf16.gmra.mxu0 %v247
        %v370 = vpop.f32.mrf.mxu0
        %v371 = vadd.f32 0.0, %v370
        %v372 = vpop.f32.mrf.mxu0
        %v373 = vpop.f32.mrf.mxu0
        %v374 = vadd.f32 0.0, %v373
        %v375 = vpop.f32.mrf.mxu0
        %376 = vdwg.mxu0
        %p377 = scmp.eq.s32.totalorder %s28, 0
        // Predicated region
        $region41: #{tpu_custom_call.1} parent=31 // pred_check
          %p378 = pneg %p377
        $region42: #{tpu_custom_call.1} parent=31 // pred_check_branch
          %380 = sbr.rel (%p378) target = $region44
        $region43: #{tpu_custom_call.1} parent=31 // pred_region
          %381 = vst [vmem:[#allocation2] sm:$0xff] %v347
          %382 = vst [vmem:[#allocation2 + $0x8] sm:$0xff] %v350
          %383 = vst [vmem:[#allocation2 + $0x10] sm:$0xff] %v355
          %384 = vst [vmem:[#allocation2 + $0x18] sm:$0xff] %v358
          %385 = vst [vmem:[#allocation2 + $0x20] sm:$0xff] %v363
          %386 = vst [vmem:[#allocation2 + $0x28] sm:$0xff] %v366
          %387 = vst [vmem:[#allocation2 + $0x30] sm:$0xff] %v371
          %388 = vst [vmem:[#allocation2 + $0x38] sm:$0xff] %v374
        $region44: #{tpu_custom_call.1} parent=31 // pred_fallthru
          _
        %p389 = scmp.gt.s32.totalorder %s28, 0
        // Predicated region
        $region45: #{tpu_custom_call.1} parent=31 // pred_check
          %p390 = pneg %p389
        $region46: #{tpu_custom_call.1} parent=31 // pred_check_branch
          %392 = sbr.rel (%p390) target = $region48
        $region47: #{tpu_custom_call.1} parent=31 // pred_region
          %v393 = vld [vmem:[#allocation2] sm:$0xff]
          %v394 = vld [vmem:[#allocation2 + $0x8] sm:$0xff]
          %v395 = vld [vmem:[#allocation2 + $0x10] sm:$0xff]
          %v396 = vld [vmem:[#allocation2 + $0x18] sm:$0xff]
          %v397 = vld [vmem:[#allocation2 + $0x20] sm:$0xff]
          %v398 = vld [vmem:[#allocation2 + $0x28] sm:$0xff]
          %v399 = vld [vmem:[#allocation2 + $0x30] sm:$0xff]
          %v400 = vld [vmem:[#allocation2 + $0x38] sm:$0xff]
          %v401 = vadd.f32 %v393, %v347
          %v402 = vadd.f32 %v394, %v350
          %v403 = vadd.f32 %v395, %v355
          %v404 = vadd.f32 %v396, %v358
          %v405 = vadd.f32 %v397, %v363
          %v406 = vadd.f32 %v398, %v366
          %v407 = vadd.f32 %v399, %v371
          %v408 = vadd.f32 %v400, %v374
          %409 = vst [vmem:[#allocation2] sm:$0xff] %v401
          %410 = vst [vmem:[#allocation2 + $0x8] sm:$0xff] %v402
          %411 = vst [vmem:[#allocation2 + $0x10] sm:$0xff] %v403
          %412 = vst [vmem:[#allocation2 + $0x18] sm:$0xff] %v404
          %413 = vst [vmem:[#allocation2 + $0x20] sm:$0xff] %v405
          %414 = vst [vmem:[#allocation2 + $0x28] sm:$0xff] %v406
          %415 = vst [vmem:[#allocation2 + $0x30] sm:$0xff] %v407
          %416 = vst [vmem:[#allocation2 + $0x38] sm:$0xff] %v408
        $region48: #{tpu_custom_call.1} parent=31 // pred_fallthru
          _
        // Predicated region
        $region49: #{tpu_custom_call.1} parent=31 // pred_check
          %p417 = pneg %p377
        $region50: #{tpu_custom_call.1} parent=31 // pred_check_branch
          %419 = sbr.rel (%p417) target = $region52
        $region51: #{tpu_custom_call.1} parent=31 // pred_region
          %v420 = vld [vmem:[#allocation2] sm:$0xff]
          %v421 = vld [vmem:[#allocation2 + $0x8] sm:$0xff]
          %v422 = vld [vmem:[#allocation2 + $0x10] sm:$0xff]
          %v423 = vld [vmem:[#allocation2 + $0x18] sm:$0xff]
          %v424 = vld [vmem:[#allocation2 + $0x20] sm:$0xff]
          %v425 = vld [vmem:[#allocation2 + $0x28] sm:$0xff]
          %v426 = vld [vmem:[#allocation2 + $0x30] sm:$0xff]
          %v427 = vld [vmem:[#allocation2 + $0x38] sm:$0xff]
          %v428 = vmax.f32 %v420, 1.0
          %v429 = vmax.f32 %v421, 1.0
          %v430 = vmax.f32 %v422, 1.0
          %v431 = vmax.f32 %v423, 1.0
          %v432 = vmax.f32 %v424, 1.0
          %v433 = vmax.f32 %v425, 1.0
          %v434 = vmax.f32 %v426, 1.0
          %v435 = vmax.f32 %v427, 1.0
          %v436 = vrcp.pop %v428
          %v437 = vrcp.pop %v429
          %v438 = vrcp.pop %v430
          %v439 = vrcp.pop %v431
          %v440 = vrcp.pop %v432
          %v441 = vrcp.pop %v433
          %v442 = vrcp.pop %v434
          %v443 = vrcp.pop %v435
          %445 = vset.pattern.permute.xlu0 32
          %446 = vperm.xlu0 %445, %v436
          %v447 = vpop.permute.xlu0 %446
          %450 = vset.pattern.permute.xlu0 32
          %451 = vperm.xlu0 %450, %v437
          %v452 = vpop.permute.xlu0 %451
          %455 = vset.pattern.permute.xlu0 32
          %456 = vperm.xlu0 %455, %v438
          %v457 = vpop.permute.xlu0 %456
          %460 = vset.pattern.permute.xlu0 32
          %461 = vperm.xlu0 %460, %v439
          %v462 = vpop.permute.xlu0 %461
          %465 = vset.pattern.permute.xlu0 32
          %466 = vperm.xlu0 %465, %v440
          %v467 = vpop.permute.xlu0 %466
          %470 = vset.pattern.permute.xlu0 32
          %471 = vperm.xlu0 %470, %v441
          %v472 = vpop.permute.xlu0 %471
          %475 = vset.pattern.permute.xlu0 32
          %476 = vperm.xlu0 %475, %v442
          %v477 = vpop.permute.xlu0 %476
          %480 = vset.pattern.permute.xlu0 32
          %481 = vperm.xlu0 %480, %v443
          %v482 = vpop.permute.xlu0 %481
          %v484 = vmul.f32 %v420, %v447
          %v485 = vmul.f32 %v421, %v452
          %v486 = vmul.f32 %v422, %v457
          %v487 = vmul.f32 %v423, %v462
          %v488 = vmul.f32 %v424, %v467
          %v489 = vmul.f32 %v425, %v472
          %v490 = vmul.f32 %v426, %v477
          %v491 = vmul.f32 %v427, %v482
          %p492 = scmp.eq.s32.totalorder %s27, 0
          // Predicated region
          $region53: #{tpu_custom_call.1} parent=51 // pred_check
            %p493 = pneg %p492
          $region54: #{tpu_custom_call.1} parent=51 // pred_check_branch
            %495 = sbr.rel (%p493) target = $region56
          $region55: #{tpu_custom_call.1} parent=51 // pred_region
            %496 = vst [vmem:[#allocation3] sm:$0xff] %v484
            %497 = vst [vmem:[#allocation3 + $0x8] sm:$0xff] %v485
            %498 = vst [vmem:[#allocation3 + $0x10] sm:$0xff] %v486
            %499 = vst [vmem:[#allocation3 + $0x18] sm:$0xff] %v487
            %500 = vst [vmem:[#allocation3 + $0x20] sm:$0xff] %v488
            %501 = vst [vmem:[#allocation3 + $0x28] sm:$0xff] %v489
            %502 = vst [vmem:[#allocation3 + $0x30] sm:$0xff] %v490
            %503 = vst [vmem:[#allocation3 + $0x38] sm:$0xff] %v491
          $region56: #{tpu_custom_call.1} parent=51 // pred_fallthru
            _
          %p504 = scmp.gt.s32.totalorder %s27, 0
          // Predicated region
          $region57: #{tpu_custom_call.1} parent=51 // pred_check
            %p505 = pneg %p504
          $region58: #{tpu_custom_call.1} parent=51 // pred_check_branch
            %507 = sbr.rel (%p505) target = $region60
          $region59: #{tpu_custom_call.1} parent=51 // pred_region
            %v508 = vld [vmem:[#allocation3] sm:$0xff]
            %v509 = vld [vmem:[#allocation3 + $0x8] sm:$0xff]
            %v510 = vld [vmem:[#allocation3 + $0x10] sm:$0xff]
            %v511 = vld [vmem:[#allocation3 + $0x18] sm:$0xff]
            %v512 = vld [vmem:[#allocation3 + $0x20] sm:$0xff]
            %v513 = vld [vmem:[#allocation3 + $0x28] sm:$0xff]
            %v514 = vld [vmem:[#allocation3 + $0x30] sm:$0xff]
            %v515 = vld [vmem:[#allocation3 + $0x38] sm:$0xff]
            %v516 = vadd.f32 %v508, %v484
            %v517 = vadd.f32 %v509, %v485
            %v518 = vadd.f32 %v510, %v486
            %v519 = vadd.f32 %v511, %v487
            %v520 = vadd.f32 %v512, %v488
            %v521 = vadd.f32 %v513, %v489
            %v522 = vadd.f32 %v514, %v490
            %v523 = vadd.f32 %v515, %v491
            %524 = vst [vmem:[#allocation3] sm:$0xff] %v516
            %525 = vst [vmem:[#allocation3 + $0x8] sm:$0xff] %v517
            %526 = vst [vmem:[#allocation3 + $0x10] sm:$0xff] %v518
            %527 = vst [vmem:[#allocation3 + $0x18] sm:$0xff] %v519
            %528 = vst [vmem:[#allocation3 + $0x20] sm:$0xff] %v520
            %529 = vst [vmem:[#allocation3 + $0x28] sm:$0xff] %v521
            %530 = vst [vmem:[#allocation3 + $0x30] sm:$0xff] %v522
            %531 = vst [vmem:[#allocation3 + $0x38] sm:$0xff] %v523
          $region60: #{tpu_custom_call.1} parent=51 // pred_fallthru
            _
          %p532 = scmp.eq.s32.totalorder %s27, 2
          // Predicated region
          $region61: #{tpu_custom_call.1} parent=51 // pred_check
            %p533 = pneg %p532
          $region62: #{tpu_custom_call.1} parent=51 // pred_check_branch
            %535 = sbr.rel (%p533) target = $region64
          $region63: #{tpu_custom_call.1} parent=51 // pred_region
            %v536 = vld [vmem:[#allocation3] sm:$0xff]
            %v537 = vld [vmem:[#allocation3 + $0x8] sm:$0xff]
            %v538 = vld [vmem:[#allocation3 + $0x10] sm:$0xff]
            %v539 = vld [vmem:[#allocation3 + $0x18] sm:$0xff]
            %v540 = vld [vmem:[#allocation3 + $0x20] sm:$0xff]
            %v541 = vld [vmem:[#allocation3 + $0x28] sm:$0xff]
            %v542 = vld [vmem:[#allocation3 + $0x30] sm:$0xff]
            %v543 = vld [vmem:[#allocation3 + $0x38] sm:$0xff]
            %v544 = vld [vmem:[%s2] sm:$0x1]
            %v546 = vlaneseq
            %v547 = vshrl.u32 %v546, 7
            %v548 = vsub.s32 0, %v547
            %v549 = vrot.slane %v544, %v548
            %v551 = vadd.f32 %v536, %v549
            %v552 = vadd.f32 %v537, %v549
            %v553 = vadd.f32 %v538, %v549
            %v554 = vadd.f32 %v539, %v549
            %v555 = vadd.f32 %v540, %v549
            %v556 = vadd.f32 %v541, %v549
            %v557 = vadd.f32 %v542, %v549
            %v558 = vadd.f32 %v543, %v549
            %v559 = vmax.f32 %v551, 0.0
            %v560 = vmax.f32 %v552, 0.0
            %v561 = vmax.f32 %v553, 0.0
            %v562 = vmax.f32 %v554, 0.0
            %v563 = vmax.f32 %v555, 0.0
            %v564 = vmax.f32 %v556, 0.0
            %v565 = vmax.f32 %v557, 0.0
            %v566 = vmax.f32 %v558, 0.0
            %v567 = vlaneseq
            %v568 = vand.u32 %v567, 127
            %vm569 = vcmp.eq.s32.totalorder %v568, 32
            %vm570 = vcmp.gt.s32.totalorder %v568, 32
            %v571 = vsel %vm570, 0.0, %v559
            %v572 = vsel %vm570, 0.0, %v560
            %v573 = vsel %vm570, 0.0, %v561
            %v574 = vsel %vm570, 0.0, %v562
            %v575 = vsel %vm570, 0.0, %v563
            %v576 = vsel %vm570, 0.0, %v564
            %v577 = vsel %vm570, 0.0, %v565
            %v578 = vsel %vm570, 0.0, %v566
            %v579 = vsel %vm569, 1.0, %v571
            %v580 = vsel %vm569, 1.0, %v572
            %v581 = vsel %vm569, 1.0, %v573
            %v582 = vsel %vm569, 1.0, %v574
            %v583 = vsel %vm569, 1.0, %v575
            %v584 = vsel %vm569, 1.0, %v576
            %v585 = vsel %vm569, 1.0, %v577
            %v586 = vsel %vm569, 1.0, %v578
            %v587 = vpack.c.bf16 %v580, %v579
            %v588 = vpack.c.bf16 %v582, %v581
            %v589 = vpack.c.bf16 %v584, %v583
            %v590 = vpack.c.bf16 %v586, %v585
            %v595 = vunpack.c.l.b16 %v587
            %v596 = vunpack.c.h.b16 %v587
            %v597 = vunpack.c.l.b16 %v588
            %v598 = vunpack.c.h.b16 %v588
            %v599 = vunpack.c.l.b16 %v589
            %v600 = vunpack.c.h.b16 %v589
            %v601 = vunpack.c.l.b16 %v590
            %v602 = vunpack.c.h.b16 %v590
            %v603 = vpack.c.b16 %v595, %v595
            %v604 = vpack.c.b16 %v596, %v596
            %v605 = vpack.c.b16 %v597, %v597
            %v606 = vpack.c.b16 %v598, %v598
            %v607 = vpack.c.b16 %v599, %v599
            %v608 = vpack.c.b16 %v600, %v600
            %v609 = vpack.c.b16 %v601, %v601
            %v610 = vpack.c.b16 %v602, %v602
            %619 = vst [vmem:[%s237] sm:$0xf] %v603
            %620 = vst [vmem:[%s237 + $0x4] sm:$0xf] %v604
            %621 = vst [vmem:[%s237 + $0x8] sm:$0xf] %v605
            %622 = vst [vmem:[%s237 + $0xc] sm:$0xf] %v606
            %623 = vst [vmem:[%s237 + $0x10] sm:$0xf] %v607
            %624 = vst [vmem:[%s237 + $0x14] sm:$0xf] %v608
            %625 = vst [vmem:[%s237 + $0x18] sm:$0xf] %v609
            %626 = vst [vmem:[%s237 + $0x1c] sm:$0xf] %v610
          $region64: #{tpu_custom_call.1} parent=51 // pred_fallthru
            _
        $region52: #{tpu_custom_call.1} parent=31 // pred_fallthru
          _
        %s627 = sand.u32 %s125, 1
        %s628 = scalar_lea.sflag [#allocation6], %s627
        %s629 = sand.u32 %s125, 1
        %s630 = smul.addr %s629, 32
        %s631 = scalar_lea.vmem [#allocation9], %s630
        // Predicated region
        $region65: #{tpu_custom_call.1} parent=31 // pred_check
          %p632 = pneg %p135
        $region66: #{tpu_custom_call.1} parent=31 // pred_check_branch
          %634 = sbr.rel (%p632) target = $region68
        $region67: #{tpu_custom_call.1} parent=31 // pred_region
          %s635 = smul.u32 8, %s26
          %s637 = ssub.s32 512, 512
          %638 = vsyncadd %s628, %s637
          %s639 = smul.addr %s635, 64
          %s640 = scalar_lea.hbm %s3, %s639
          %s641 = sshll.u32 %s631, 4
          %s642 = int_to_ptr.vmem [resolvable:$true] %s641
          %647 = dma.vmem_to_hbm [thread:$0]  %s642, 512, %s640, %s628, 64, 64, 4
        $region68: #{tpu_custom_call.1} parent=31 // pred_fallthru
          _
      $region32: #{tpu_custom_call.1} parent=5 // pred_fallthru
        _
      %p648 = scmp.le.s32.totalorder 2, %s16
      // Predicated region
      $region69: #{tpu_custom_call.1} parent=5 // pred_check
        %p649 = pneg %p648
      $region70: #{tpu_custom_call.1} parent=5 // pred_check_branch
        %651 = sbr.rel (%p649) target = $region72
      $region71: #{tpu_custom_call.1} parent=5 // pred_region
        %s652 = ssub.s32 %s16, 2
        // Predicated region
        $region73: #{tpu_custom_call.1} parent=71 // pred_check
          %p653 = pneg %p141
        $region74: #{tpu_custom_call.1} parent=71 // pred_check_branch
          %655 = sbr.rel (%p653) target = $region76
        $region75: #{tpu_custom_call.1} parent=71 // pred_region
          %s656 = sand.u32 %s126, 1
          %s657 = scalar_lea.sflag [#allocation6], %s656
          %s658 = sand.u32 %s126, 1
          %s659 = smul.addr %s658, 32
          %s660 = scalar_lea.vmem [#allocation9], %s659
          %661 = dma.done %s657, 512
        $region76: #{tpu_custom_call.1} parent=71 // pred_fallthru
          _
      $region72: #{tpu_custom_call.1} parent=5 // pred_fallthru
        _
    $region6: #{tpu_custom_call.1} parent=1 // loop_footer
      %s20 = sadd.s32 1, %s16
    $region7: #{tpu_custom_call.1} parent=1 // loop_footer_branch
      %15 = sbr.rel target = $region3
    $region8: #{tpu_custom_call.1} parent=1 // loop_exit
      _
    %662 = vsyncpa [#allocation5], 1
    %s663 = scalar_lea.sflag [#allocation5], 1
    %664 = vsyncpa %s663, 1
    %665 = vsyncpa [#allocation8], 1
    %666 = vsyncpa [#allocation6], 1
    %s667 = scalar_lea.sflag [#allocation6], 1
    %668 = vsyncpa %s667, 1

</llo_original>
